<compile_context>
chip_gen: v5e
topology: v5e:2x2
jax: 0.10.0
libtpu: 0.0.40
codegen_flags: <defaults>
</compile_context>

<pallas_src>
import jax
import jax.numpy as jnp
from jax import lax
from jax.experimental import pallas as pl
from jax.experimental.pallas import tpu as pltpu


def afm_kernel(x_ref, s_ref, wx_ref, ws_ref, ax_ref, as_ref, b_ref, out_ref):
    # x_ref / s_ref: (C, T) tile, spatial on lanes (storage dtype, possibly bf16).
    # wx_ref / ws_ref: shared stacked weights (C+1, C) = [w_redu_half ; w_att2_row], f32.
    # ax_ref / as_ref: per-batch channel attention rows (1, C), f32.
    # b_ref: folded bias (b1+b2) scalar in SMEM.
    c_out, c_in = wx_ref.shape            # (C+1, C)
    x = x_ref[...]
    s = s_ref[...]

    # Fold per-batch attention into the columns of the first C rows of the
    # stacked weights; the last row (att2 weights) stays unscaled.
    row = lax.broadcasted_iota(jnp.int32, (c_out, c_in), 0)
    is_redu = row < (c_out - 1)
    wxa = (wx_ref[...] * jnp.where(is_redu, ax_ref[...], 1.0)).astype(x.dtype)
    wsa = (ws_ref[...] * jnp.where(is_redu, as_ref[...], 1.0)).astype(s.dtype)

    # One fused pair of dots: rows 0..C-1 = conv_redu(cat*att), row C = att2 logits.
    allr = (jnp.dot(wxa, x, preferred_element_type=jnp.float32)
            + jnp.dot(wsa, s, preferred_element_type=jnp.float32))   # (C+1, T) f32

    out = allr[: c_out - 1, :]                                        # (C, T)
    logit = allr[c_out - 1: c_out, :] + b_ref[0]                      # (1, T)
    out_ref[...] = (out * jax.nn.sigmoid(logit)).astype(out_ref.dtype)


def _pick_hw_tile(hwp, c, itemsize, target_bytes=2 << 20, vmem_budget=40 << 20):
    """Largest multiple-of-128 divisor of hwp whose (C, thw) input tile is
    ~target_bytes, capped so the double-buffered x/s/out working set fits the
    smallest (v7x, 64 MiB) VMEM with headroom."""
    per_lane = max(1, c * itemsize)
    tgt = max(128, target_bytes // per_lane)
    cap = max(128, vmem_budget // (6 * per_lane))   # 3 arrays x 2 buffers
    tgt = (min(tgt, cap) // 128) * 128
    tgt = max(tgt, 128)
    if hwp <= tgt:
        return hwp
    best = 128
    t = 128
    while t <= tgt:
        if hwp % t == 0:
            best = t
        t += 128
    return best


def afm_forward(x_nchw, skip_nchw, params, storage_dtype=None, hw_tile=None):
    N, C, H, W = x_nchw.shape
    HW = H * W

    # Free views: NCHW -> (N, C, HW), spatial flattened onto the lane axis.
    x3 = x_nchw.reshape(N, C, HW)
    s3 = skip_nchw.reshape(N, C, HW)

    # ---- tiny pre-pass: AdaptiveAvgPool2d(1) + channel attention (O(N*C^2)) ----
    px = jnp.mean(x3.astype(jnp.float32), axis=2)                       # (N, C)
    ps = jnp.mean(s3.astype(jnp.float32), axis=2)                       # (N, C)
    w_att = params["w_att"].astype(jnp.float32)                         # (2C, 2C) (out, in)
    att = jax.nn.sigmoid(jnp.concatenate([px, ps], axis=1) @ w_att.T)   # (N, 2C)
    att_x = att[:, :C].reshape(N, 1, C)
    att_s = att[:, C:].reshape(N, 1, C)

    # Shared (grid-constant) stacked weights: [conv_redu half ; att2 row].
    w_redu = params["w_redu"].astype(jnp.float32)                       # (C, 2C)
    w1 = params["w1"].astype(jnp.float32).reshape(1, C)
    w2 = params["w2"].astype(jnp.float32).reshape(1, C)
    wx = jnp.concatenate([w_redu[:, :C], w1], axis=0)                   # (C+1, C)
    ws = jnp.concatenate([w_redu[:, C:], w2], axis=0)                   # (C+1, C)
    bias = (params["b1"] + params["b2"]).astype(jnp.float32).reshape(1)

    if storage_dtype is not None:
        x3 = x3.astype(storage_dtype)
        s3 = s3.astype(storage_dtype)
    out_dtype = x3.dtype
    itemsize = jnp.dtype(out_dtype).itemsize

    # Pad spatial to a multiple of 128 so tiles stay lane-dense and bounded.
    HWp = ((HW + 127) // 128) * 128
    if HWp != HW:
        pad = HWp - HW
        x3 = jnp.pad(x3, ((0, 0), (0, 0), (0, pad)))
        s3 = jnp.pad(s3, ((0, 0), (0, 0), (0, pad)))

    thw = hw_tile if hw_tile is not None else _pick_hw_tile(HWp, C, itemsize)
    assert HWp % thw == 0 and thw % 128 == 0, "bad spatial tile"
    grid = (N, HWp // thw)

    data_spec = pl.BlockSpec((pl.Squeezed(), C, thw), lambda bb, tt: (bb, 0, tt))
    wmat_spec = pl.BlockSpec((C + 1, C), lambda bb, tt: (0, 0))
    attv_spec = pl.BlockSpec((pl.Squeezed(), 1, C), lambda bb, tt: (bb, 0, 0))
    smem_spec = pl.BlockSpec(memory_space=pltpu.MemorySpace.SMEM)

    tile_bytes = C * thw * itemsize
    vmem_limit = min(max(int(6 * tile_bytes) + (4 << 20), 32 << 20), 56 << 20)

    out = pl.pallas_call(
        afm_kernel,
        out_shape=jax.ShapeDtypeStruct((N, C, HWp), out_dtype),
        grid_spec=pltpu.PrefetchScalarGridSpec(
            num_scalar_prefetch=0,
            grid=grid,
            in_specs=[data_spec, data_spec,        # x, skip tiles
                      wmat_spec, wmat_spec,        # shared stacked weights
                      attv_spec, attv_spec,        # per-batch channel attention
                      smem_spec],                  # folded bias scalar
            out_specs=data_spec,
        ),
        compiler_params=pltpu.CompilerParams(
            dimension_semantics=("parallel", "parallel"),
            vmem_limit_bytes=vmem_limit),
    )(x3, s3, wx, ws, att_x, att_s, bias)

    if HWp != HW:
        out = out[:, :, :HW]
    return out.reshape(N, C, H, W)


def afm_reference(x, skip, params):
    # Pure-JAX reference matching the PyTorch forward (NCHW, f32).
    N, C, H, W = x.shape
    cat = jnp.concatenate([x, skip], axis=1)                            # (N, 2C, H, W)
    pooled = jnp.mean(cat, axis=(2, 3), keepdims=True)                  # (N, 2C, 1, 1)
    att = jax.nn.sigmoid(jnp.einsum('oi,nihw->nohw', params["w_att"], pooled))
    out = cat * att
    out = jnp.einsum('oi,nihw->nohw', params["w_redu"], out)
    a = (jnp.einsum('oi,nihw->nohw', params["w1"].reshape(1, C), x) + params["b1"]
         + jnp.einsum('oi,nihw->nohw', params["w2"].reshape(1, C), skip) + params["b2"])
    return out * jax.nn.sigmoid(a)


if __name__ == "__main__":
    key = jax.random.PRNGKey(0)
    N, dim, H, W = 2, 4, 16, 16
    ks = jax.random.split(key, 10)

    x = jax.random.normal(ks[0], (N, dim, H, W), jnp.float32)
    skip = jax.random.normal(ks[1], (N, dim, H, W), jnp.float32)

    params = {
        "w_att": 0.3 * jax.random.normal(ks[2], (2 * dim, 2 * dim), jnp.float32),
        "w_redu": 0.3 * jax.random.normal(ks[3], (dim, 2 * dim), jnp.float32),
        "w1": 0.3 * jax.random.normal(ks[4], (dim,), jnp.float32),
        "w2": 0.3 * jax.random.normal(ks[5], (dim,), jnp.float32),
        "b1": 0.1 * jax.random.normal(ks[6], (), jnp.float32),
        "b2": 0.1 * jax.random.normal(ks[7], (), jnp.float32),
    }

    ref = afm_reference(x, skip, params)

    # f32 path, forcing 2 spatial tiles of 128 lanes to exercise the grid axis.
    out_f32 = jax.block_until_ready(afm_forward(x, skip, params, hw_tile=128))
    assert out_f32.shape == (N, dim, H, W)
    assert jnp.max(jnp.abs(out_f32 - ref)) < 1e-4, "f32 (tiled) mismatch vs reference"

    # f32 path with the automatic bytes-per-step tile selection.
    out_auto = jax.block_until_ready(afm_forward(x, skip, params))
    assert jnp.max(jnp.abs(out_auto - ref)) < 1e-4, "f32 (auto-tile) mismatch vs reference"

    # bf16 storage path (bf16 straight into the MXU, f32 accumulation).
    out_bf16 = jax.block_until_ready(
        afm_forward(x, skip, params, storage_dtype=jnp.bfloat16))
    assert jnp.max(jnp.abs(out_bf16.astype(jnp.float32) - ref)) < 1e-1, \
        "bf16 mismatch vs reference"

    # Non-multiple-of-128 spatial size: exercises the lane-padding path.
    Ho = Wo = 10
    xo = jax.random.normal(ks[8], (N, dim, Ho, Wo), jnp.float32)
    so = jax.random.normal(ks[9], (N, dim, Ho, Wo), jnp.float32)
    ref_o = afm_reference(xo, so, params)
    out_o = jax.block_until_ready(afm_forward(xo, so, params))
    assert jnp.max(jnp.abs(out_o - ref_o)) < 1e-4, "padded-HW mismatch vs reference"

    print("KERNEL_OK")
</pallas_src>

<mosaic_0001>
module attributes {stable_mosaic.version = 11 : i64} {
  func.func @afm_kernel(%arg0: i32, %arg1: i32, %arg2: memref<1x4x128xf32, #tpu.memory_space<vmem>>, %arg3: memref<1x4x128xf32, #tpu.memory_space<vmem>>, %arg4: memref<5x4xf32, #tpu.memory_space<vmem>>, %arg5: memref<5x4xf32, #tpu.memory_space<vmem>>, %arg6: memref<1x1x4xf32, #tpu.memory_space<vmem>>, %arg7: memref<1x1x4xf32, #tpu.memory_space<vmem>>, %arg8: memref<1xf32, #tpu.memory_space<smem>>, %arg9: memref<1x4x128xf32, #tpu.memory_space<vmem>>) attributes {dimension_semantics = [#tpu.dimension_semantics<parallel>, #tpu.dimension_semantics<parallel>], iteration_bounds = array<i64: 2, 2>, scalar_prefetch = 0 : i64, scratch_operands = 0 : i64, tpu.core_type = #tpu.core_type<tc>, window_params = [{transform_indices = @transform_0, window_bounds = array<i64: 1, 4, 128>}, {transform_indices = @transform_1, window_bounds = array<i64: 1, 4, 128>}, {pipeline_mode = #tpu.pipeline_mode<synchronous>, transform_indices = @transform_2, window_bounds = array<i64: 5, 4>}, {pipeline_mode = #tpu.pipeline_mode<synchronous>, transform_indices = @transform_3, window_bounds = array<i64: 5, 4>}, {transform_indices = @transform_4, window_bounds = array<i64: 1, 1, 4>}, {transform_indices = @transform_5, window_bounds = array<i64: 1, 1, 4>}, {transform_indices = @transform_6, window_bounds = array<i64: 1>}, {transform_indices = @transform_7, window_bounds = array<i64: 1, 4, 128>}]} {
    %c0 = arith.constant 0 : index
    %c0_0 = arith.constant 0 : index
    %c0_1 = arith.constant 0 : index
    %0 = vector.load %arg2[%c0, %c0_0, %c0_1] : memref<1x4x128xf32, #tpu.memory_space<vmem>>, vector<1x4x128xf32>
    %1 = vector.shape_cast %0 : vector<1x4x128xf32> to vector<4x128xf32>
    %c0_2 = arith.constant 0 : index
    %c0_3 = arith.constant 0 : index
    %c0_4 = arith.constant 0 : index
    %2 = vector.load %arg3[%c0_2, %c0_3, %c0_4] : memref<1x4x128xf32, #tpu.memory_space<vmem>>, vector<1x4x128xf32>
    %3 = vector.shape_cast %2 : vector<1x4x128xf32> to vector<4x128xf32>
    %4 = tpu.iota {dimensions = array<i32: 0>} : vector<5x4xi32>
    %c4_i32 = arith.constant 4 : i32
    %5 = vector.broadcast %c4_i32 : i32 to vector<5x4xi32>
    %6 = arith.cmpi slt, %4, %5 : vector<5x4xi32>
    %c0_5 = arith.constant 0 : index
    %c0_6 = arith.constant 0 : index
    %7 = vector.load %arg4[%c0_5, %c0_6] : memref<5x4xf32, #tpu.memory_space<vmem>>, vector<5x4xf32>
    %c0_7 = arith.constant 0 : index
    %c0_8 = arith.constant 0 : index
    %c0_9 = arith.constant 0 : index
    %8 = vector.load %arg6[%c0_7, %c0_8, %c0_9] : memref<1x1x4xf32, #tpu.memory_space<vmem>>, vector<1x1x4xf32>
    %9 = vector.shape_cast %8 : vector<1x1x4xf32> to vector<1x4xf32>
    %cst = arith.constant 1.000000e+00 : f32
    %10 = vector.shape_cast %9 : vector<1x4xf32> to vector<1x4xf32>
    %11 = vector.broadcast %10 : vector<1x4xf32> to vector<5x4xf32>
    %12 = vector.broadcast %cst : f32 to vector<5x4xf32>
    %13 = arith.select %6, %11, %12 : vector<5x4xi1>, vector<5x4xf32>
    %14 = arith.mulf %7, %13 : vector<5x4xf32>
    %c0_10 = arith.constant 0 : index
    %c0_11 = arith.constant 0 : index
    %15 = vector.load %arg5[%c0_10, %c0_11] : memref<5x4xf32, #tpu.memory_space<vmem>>, vector<5x4xf32>
    %c0_12 = arith.constant 0 : index
    %c0_13 = arith.constant 0 : index
    %c0_14 = arith.constant 0 : index
    %16 = vector.load %arg7[%c0_12, %c0_13, %c0_14] : memref<1x1x4xf32, #tpu.memory_space<vmem>>, vector<1x1x4xf32>
    %17 = vector.shape_cast %16 : vector<1x1x4xf32> to vector<1x4xf32>
    %cst_15 = arith.constant 1.000000e+00 : f32
    %18 = vector.shape_cast %17 : vector<1x4xf32> to vector<1x4xf32>
    %19 = vector.broadcast %18 : vector<1x4xf32> to vector<5x4xf32>
    %20 = vector.broadcast %cst_15 : f32 to vector<5x4xf32>
    %21 = arith.select %6, %19, %20 : vector<5x4xi1>, vector<5x4xf32>
    %22 = arith.mulf %15, %21 : vector<5x4xf32>
    %cst_16 = arith.constant dense<0.000000e+00> : vector<5x128xf32>
    %23 = tpu.matmul %14, %1, %cst_16 {dimension_numbers = #tpu.dot_dimension_numbers<[1], [0], [0], [1], [0, 0, 1, 1], [], []>} : vector<5x4xf32>, vector<4x128xf32>, vector<5x128xf32> -> vector<5x128xf32>
    %cst_17 = arith.constant dense<0.000000e+00> : vector<5x128xf32>
    %24 = tpu.matmul %22, %3, %cst_17 {dimension_numbers = #tpu.dot_dimension_numbers<[1], [0], [0], [1], [0, 0, 1, 1], [], []>} : vector<5x4xf32>, vector<4x128xf32>, vector<5x128xf32> -> vector<5x128xf32>
    %25 = arith.addf %23, %24 : vector<5x128xf32>
    %26 = vector.extract_strided_slice %25 {offsets = [0, 0], sizes = [4, 128], strides = [1, 1]} : vector<5x128xf32> to vector<4x128xf32>
    %27 = vector.extract_strided_slice %25 {offsets = [4, 0], sizes = [1, 128], strides = [1, 1]} : vector<5x128xf32> to vector<1x128xf32>
    %c0_18 = arith.constant 0 : index
    %28 = memref.load %arg8[%c0_18] : memref<1xf32, #tpu.memory_space<smem>>
    %29 = vector.broadcast %28 : f32 to vector<1x128xf32>
    %30 = arith.addf %27, %29 : vector<1x128xf32>
    %31 = arith.negf %30 : vector<1x128xf32>
    %32 = math.exp %31 : vector<1x128xf32>
    %cst_19 = arith.constant 1.000000e+00 : f32
    %33 = vector.broadcast %cst_19 : f32 to vector<1x128xf32>
    %34 = arith.addf %33, %32 : vector<1x128xf32>
    %35 = arith.divf %33, %34 : vector<1x128xf32>
    %36 = vector.broadcast %35 : vector<1x128xf32> to vector<4x128xf32>
    %37 = arith.mulf %26, %36 : vector<4x128xf32>
    %c0_20 = arith.constant 0 : index
    %c0_21 = arith.constant 0 : index
    %c0_22 = arith.constant 0 : index
    %38 = vector.load %arg9[%c0_20, %c0_21, %c0_22] : memref<1x4x128xf32, #tpu.memory_space<vmem>>, vector<1x4x128xf32>
    %39 = vector.shape_cast %38 : vector<1x4x128xf32> to vector<4x128xf32>
    %40 = vector.shape_cast %37 : vector<4x128xf32> to vector<1x4x128xf32>
    tpu.vector_store %arg9[%c0_20, %c0_21, %c0_22], %40 {strides = array<i32>} : memref<1x4x128xf32, #tpu.memory_space<vmem>>, vector<1x4x128xf32>,
    return
  }
  func.func @transform_0(%arg0: i32, %arg1: i32) -> (i32, i32, i32) {
    %c0_i32 = arith.constant 0 : i32
    %c0_i32_0 = arith.constant 0 : i32
    return %arg0, %c0_i32, %arg1 : i32, i32, i32
  }
  func.func @transform_1(%arg0: i32, %arg1: i32) -> (i32, i32, i32) {
    %c0_i32 = arith.constant 0 : i32
    %c0_i32_0 = arith.constant 0 : i32
    return %arg0, %c0_i32, %arg1 : i32, i32, i32
  }
  func.func @transform_2(%arg0: i32, %arg1: i32) -> (i32, i32) {
    %c0_i32 = arith.constant 0 : i32
    %c0_i32_0 = arith.constant 0 : i32
    %c0_i32_1 = arith.constant 0 : i32
    return %c0_i32, %c0_i32_0 : i32, i32
  }
  func.func @transform_3(%arg0: i32, %arg1: i32) -> (i32, i32) {
    %c0_i32 = arith.constant 0 : i32
    %c0_i32_0 = arith.constant 0 : i32
    %c0_i32_1 = arith.constant 0 : i32
    return %c0_i32, %c0_i32_0 : i32, i32
  }
  func.func @transform_4(%arg0: i32, %arg1: i32) -> (i32, i32, i32) {
    %c0_i32 = arith.constant 0 : i32
    %c0_i32_0 = arith.constant 0 : i32
    %c0_i32_1 = arith.constant 0 : i32
    return %arg0, %c0_i32, %c0_i32_0 : i32, i32, i32
  }
  func.func @transform_5(%arg0: i32, %arg1: i32) -> (i32, i32, i32) {
    %c0_i32 = arith.constant 0 : i32
    %c0_i32_0 = arith.constant 0 : i32
    %c0_i32_1 = arith.constant 0 : i32
    return %arg0, %c0_i32, %c0_i32_0 : i32, i32, i32
  }
  func.func @transform_6(%arg0: i32, %arg1: i32) -> i32 {
    %c0_i32 = arith.constant 0 : i32
    %c0_i32_0 = arith.constant 0 : i32
    return %c0_i32 : i32
  }
  func.func @transform_7(%arg0: i32, %arg1: i32) -> (i32, i32, i32) {
    %c0_i32 = arith.constant 0 : i32
    %c0_i32_0 = arith.constant 0 : i32
    return %arg0, %c0_i32, %arg1 : i32, i32, i32
  }
}

</mosaic_0001>

<llo_original>
// kernel: tpu_custom_call.1
$region0: #{tpu_custom_call.1}
  #allocation0 [shape = 'u32[]', space=smem, size = 0x4, offset = 0x4, fixed_abs, tag = 'smem constant byte address 0x4 - core index']
  #allocation1 [shape = 'u32[72,128]{1,0:T(1,128)}', space=vmem, size = 0x9000, scoped, tag = 'internal scratch']
  #allocation2 [shape = 'f32[1]{0:T(128)S(6)}', space=smem, size = 0x200, scoped, tag = 'scoped memory for tpu_custom_call.1']
  %s0 = inlined_call_operand.vmem [shape: f32[2,4,256], index: 0, kind: input, shape index: {}]
  %s1 = inlined_call_operand.hbm [shape: f32[2,4,256], index: 1, kind: input, shape index: {}]
  %s2 = inlined_call_operand.vmem [shape: f32[5,4], index: 2, kind: input, shape index: {}]
  %s3 = inlined_call_operand.vmem [shape: f32[5,4], index: 3, kind: input, shape index: {}]
  %s4 = inlined_call_operand.vmem [shape: f32[2,1,4], index: 4, kind: input, shape index: {}]
  %s5 = inlined_call_operand.vmem [shape: f32[2,1,4], index: 5, kind: input, shape index: {}]
  %s6 = inlined_call_operand.<no memory space> [shape: f32[1], index: 6, kind: input, shape index: {}]
  %s7 = inlined_call_operand.hbm [shape: f32[2,4,256], index: 7, kind: output, shape index: {}]
  %s8 = sld [smem:[#allocation0]]
  $region65: #{tpu_custom_call.1} parent=0
    _
  %s10 = ssub.s32 1, %s8
  %s11 = scalar_select 0, %s10, %s8
  %12 = sst [smem:[#allocation2]] %s6
  $region1: #{tpu_custom_call.1} parent=0
    #allocation3 [shape = 'u8[4096]{0}', space=vmem, size = 0x1000, scoped, tag = 'input window, operand 1']
    #allocation4 [shape = 's32[2]{0}', space=sflag, size = 0x8, scoped, tag = 'scoped memory for tpu_custom_call.1']
    #allocation5 [shape = 's32[2]{0}', space=sflag, size = 0x8, scoped, tag = 'scoped memory for tpu_custom_call.1']
    #allocation6 [shape = 'u8[4096]{0}', space=vmem, size = 0x1000, scoped, tag = 'output window, operand 0']
    %13 = vsyncpa [#allocation4], 0
    %s14 = scalar_lea.sflag [#allocation4], 1
    %15 = vsyncpa %s14, 0
    %16 = vsyncpa [#allocation5], 0
    %s17 = scalar_lea.sflag [#allocation5], 1
    %18 = vsyncpa %s17, 0
    loop: start=0, step=1, limit=6
    $region2: #{tpu_custom_call.1} parent=1 // loop_pre_header
      _
    $region3: #{tpu_custom_call.1} parent=1 // loop_header
      %s20 = sphi 0, %s24
      %p21 = scmp.ge.s32.totalorder %s20, 6
      %s27 = sphi 0, %s39
      %s28 = sphi 0, %s35
      %s29 = sphi 0, %s27
      %s30 = sphi 0, %s28
      %s31 = sphi 0, %s29
      %s32 = sphi 0, %s30
      %s44 = sphi 0, %s46
      %s47 = sphi 0, %s44
      %s48 = sphi 0, %s47
      %s64 = sphi 0, %s48
      %s72 = sphi 0, %s74
      %s75 = sphi 0, %s72
      %s76 = sphi 0, %s75
      %s92 = sphi 0, %s76
      %s96 = sphi 0, %s96
      %s98 = sphi 0, %s96
      %s99 = sphi 0, %s98
      %s113 = sphi 0, %s99
      %s117 = sphi 0, %s117
      %s119 = sphi 0, %s117
      %s120 = sphi 0, %s119
      %s134 = sphi 0, %s120
      %s140 = sphi 0, %s142
      %s143 = sphi 0, %s140
      %s144 = sphi 0, %s143
      %s160 = sphi 0, %s144
      %s166 = sphi 0, %s168
      %s169 = sphi 0, %s166
      %s170 = sphi 0, %s169
      %s186 = sphi 0, %s170
      %s190 = sphi 0, %s190
      %s192 = sphi 0, %s190
      %s193 = sphi 0, %s192
      %s207 = sphi 0, %s193
      %s215 = sphi 0, %s217
      %s218 = sphi 0, %s215
      %s219 = sphi 0, %s218
      %s235 = sphi 0, %s219
    $region4: #{tpu_custom_call.1} parent=1 // loop_header_branch
      %23 = sbr.rel (%p21) target = $region8
    $region5: #{tpu_custom_call.1} parent=1 // loop_body
      %s25 = ssub.s32 %s20, 1
      %s26 = ssub.s32 %s20, 2
      %s33 = sadd.s32 1, %s28
      %p34 = scmp.ge.s32.totalorder %s33, 2
      %s35 = scalar_select %p34, 0, %s33
      %s36 = sadd.s32 1, %s27
      %s37 = scalar_select %p34, %s36, %s27
      %p38 = scmp.ge.s32.totalorder %s37, 2
      %s39 = scalar_select %p38, 0, %s37
      %s40 = ssub.s32 %s27, %s39
      %s41 = ssub.s32 %s28, %s35
      %s42 = sor.u32 %s40, %s41
      %p43 = scmp.eq.s32.totalorder %s42, 0
      %s45 = sadd.s32 %s44, 1
      %s46 = scalar_select %p43, %s44, %s45
      %p49 = pneg %p43
      %p50 = scmp.eq.s32.totalorder %s20, 3
      %p51 = por %p49, %p50
      %p52 = scmp.ne.s32.totalorder %s44, %s47
      %p53 = scmp.eq.s32.totalorder %s20, 0
      %p54 = por %p52, %p53
      %p55 = scmp.ne.s32.totalorder %s44, %s47
      %p56 = scmp.eq.s32.totalorder %s25, 3
      %p57 = por %p55, %p56
      %p58 = scmp.ne.s32.totalorder %s47, %s48
      %p59 = scmp.eq.s32.totalorder %s25, 0
      %p60 = por %p58, %p59
      %p61 = scmp.ne.s32.totalorder %s47, %s48
      %p62 = scmp.eq.s32.totalorder %s26, 3
      %p63 = por %p61, %p62
      %p65 = scmp.ne.s32.totalorder %s48, %s64
      %p66 = scmp.eq.s32.totalorder %s26, 0
      %p67 = por %p65, %p66
      %s68 = ssub.s32 %s27, %s39
      %s69 = ssub.s32 %s28, %s35
      %s70 = sor.u32 %s68, %s69
      %p71 = scmp.eq.s32.totalorder %s70, 0
      %s73 = sadd.s32 %s72, 1
      %s74 = scalar_select %p71, %s72, %s73
      %p77 = pneg %p71
      %p78 = scmp.eq.s32.totalorder %s20, 3
      %p79 = por %p77, %p78
      %p80 = scmp.ne.s32.totalorder %s72, %s75
      %p81 = scmp.eq.s32.totalorder %s20, 0
      %p82 = por %p80, %p81
      %p83 = scmp.ne.s32.totalorder %s72, %s75
      %p84 = scmp.eq.s32.totalorder %s25, 3
      %p85 = por %p83, %p84
      %p86 = scmp.ne.s32.totalorder %s75, %s76
      %p87 = scmp.eq.s32.totalorder %s25, 0
      %p88 = por %p86, %p87
      %p89 = scmp.ne.s32.totalorder %s75, %s76
      %p90 = scmp.eq.s32.totalorder %s26, 3
      %p91 = por %p89, %p90
      %p93 = scmp.ne.s32.totalorder %s76, %s92
      %p94 = scmp.eq.s32.totalorder %s26, 0
      %p95 = por %p93, %p94
      %s97 = sadd.s32 %s96, 1
      %p100 = scmp.eq.s32.totalorder %s20, 3
      %p101 = scmp.ne.s32.totalorder %s96, %s98
      %p102 = scmp.eq.s32.totalorder %s20, 0
      %p103 = por %p101, %p102
      %p104 = scmp.ne.s32.totalorder %s96, %s98
      %p105 = scmp.eq.s32.totalorder %s25, 3
      %p106 = por %p104, %p105
      %p107 = scmp.ne.s32.totalorder %s98, %s99
      %p108 = scmp.eq.s32.totalorder %s25, 0
      %p109 = por %p107, %p108
      %p110 = scmp.ne.s32.totalorder %s98, %s99
      %p111 = scmp.eq.s32.totalorder %s26, 3
      %p112 = por %p110, %p111
      %p114 = scmp.ne.s32.totalorder %s99, %s113
      %p115 = scmp.eq.s32.totalorder %s26, 0
      %p116 = por %p114, %p115
      %s118 = sadd.s32 %s117, 1
      %p121 = scmp.eq.s32.totalorder %s20, 3
      %p122 = scmp.ne.s32.totalorder %s117, %s119
      %p123 = scmp.eq.s32.totalorder %s20, 0
      %p124 = por %p122, %p123
      %p125 = scmp.ne.s32.totalorder %s117, %s119
      %p126 = scmp.eq.s32.totalorder %s25, 3
      %p127 = por %p125, %p126
      %p128 = scmp.ne.s32.totalorder %s119, %s120
      %p129 = scmp.eq.s32.totalorder %s25, 0
      %p130 = por %p128, %p129
      %p131 = scmp.ne.s32.totalorder %s119, %s120
      %p132 = scmp.eq.s32.totalorder %s26, 3
      %p133 = por %p131, %p132
      %p135 = scmp.ne.s32.totalorder %s120, %s134
      %p136 = scmp.eq.s32.totalorder %s26, 0
      %p137 = por %p135, %p136
      %s138 = ssub.s32 %s27, %s39
      %p139 = scmp.eq.s32.totalorder %s138, 0
      %s141 = sadd.s32 %s140, 1
      %s142 = scalar_select %p139, %s140, %s141
      %p145 = pneg %p139
      %p146 = scmp.eq.s32.totalorder %s20, 3
      %p147 = por %p145, %p146
      %p148 = scmp.ne.s32.totalorder %s140, %s143
      %p149 = scmp.eq.s32.totalorder %s20, 0
      %p150 = por %p148, %p149
      %p151 = scmp.ne.s32.totalorder %s140, %s143
      %p152 = scmp.eq.s32.totalorder %s25, 3
      %p153 = por %p151, %p152
      %p154 = scmp.ne.s32.totalorder %s143, %s144
      %p155 = scmp.eq.s32.totalorder %s25, 0
      %p156 = por %p154, %p155
      %p157 = scmp.ne.s32.totalorder %s143, %s144
      %p158 = scmp.eq.s32.totalorder %s26, 3
      %p159 = por %p157, %p158
      %p161 = scmp.ne.s32.totalorder %s144, %s160
      %p162 = scmp.eq.s32.totalorder %s26, 0
      %p163 = por %p161, %p162
      %s164 = ssub.s32 %s27, %s39
      %p165 = scmp.eq.s32.totalorder %s164, 0
      %s167 = sadd.s32 %s166, 1
      %s168 = scalar_select %p165, %s166, %s167
      %p171 = pneg %p165
      %p172 = scmp.eq.s32.totalorder %s20, 3
      %p173 = por %p171, %p172
      %p174 = scmp.ne.s32.totalorder %s166, %s169
      %p175 = scmp.eq.s32.totalorder %s20, 0
      %p176 = por %p174, %p175
      %p177 = scmp.ne.s32.totalorder %s166, %s169
      %p178 = scmp.eq.s32.totalorder %s25, 3
      %p179 = por %p177, %p178
      %p180 = scmp.ne.s32.totalorder %s169, %s170
      %p181 = scmp.eq.s32.totalorder %s25, 0
      %p182 = por %p180, %p181
      %p183 = scmp.ne.s32.totalorder %s169, %s170
      %p184 = scmp.eq.s32.totalorder %s26, 3
      %p185 = por %p183, %p184
      %p187 = scmp.ne.s32.totalorder %s170, %s186
      %p188 = scmp.eq.s32.totalorder %s26, 0
      %p189 = por %p187, %p188
      %s191 = sadd.s32 %s190, 1
      %p194 = scmp.eq.s32.totalorder %s20, 3
      %p195 = scmp.ne.s32.totalorder %s190, %s192
      %p196 = scmp.eq.s32.totalorder %s20, 0
      %p197 = por %p195, %p196
      %p198 = scmp.ne.s32.totalorder %s190, %s192
      %p199 = scmp.eq.s32.totalorder %s25, 3
      %p200 = por %p198, %p199
      %p201 = scmp.ne.s32.totalorder %s192, %s193
      %p202 = scmp.eq.s32.totalorder %s25, 0
      %p203 = por %p201, %p202
      %p204 = scmp.ne.s32.totalorder %s192, %s193
      %p205 = scmp.eq.s32.totalorder %s26, 3
      %p206 = por %p204, %p205
      %p208 = scmp.ne.s32.totalorder %s193, %s207
      %p209 = scmp.eq.s32.totalorder %s26, 0
      %p210 = por %p208, %p209
      %s211 = ssub.s32 %s27, %s39
      %s212 = ssub.s32 %s28, %s35
      %s213 = sor.u32 %s211, %s212
      %p214 = scmp.eq.s32.totalorder %s213, 0
      %s216 = sadd.s32 %s215, 1
      %s217 = scalar_select %p214, %s215, %s216
      %p220 = pneg %p214
      %p221 = scmp.eq.s32.totalorder %s20, 3
      %p222 = por %p220, %p221
      %p223 = scmp.ne.s32.totalorder %s215, %s218
      %p224 = scmp.eq.s32.totalorder %s20, 0
      %p225 = por %p223, %p224
      %p226 = scmp.ne.s32.totalorder %s215, %s218
      %p227 = scmp.eq.s32.totalorder %s25, 3
      %p228 = por %p226, %p227
      %p229 = scmp.ne.s32.totalorder %s218, %s219
      %p230 = scmp.eq.s32.totalorder %s25, 0
      %p231 = por %p229, %p230
      %p232 = scmp.ne.s32.totalorder %s218, %s219
      %p233 = scmp.eq.s32.totalorder %s26, 3
      %p234 = por %p232, %p233
      %p236 = scmp.ne.s32.totalorder %s219, %s235
      %p237 = scmp.eq.s32.totalorder %s26, 0
      %p238 = por %p236, %p237
      %p239 = scmp.le.s32.totalorder 1, %s20
      %p240 = scmp.lt.s32.totalorder %s20, 5
      %p241 = pnand %p239, %p240
      %p242 = pneg %p241
      // Predicated region
      $region9: #{tpu_custom_call.1} parent=5 // pred_check
        _
      $region10: #{tpu_custom_call.1} parent=5 // pred_check_branch
        %244 = sbr.rel (%p241) target = $region12
      $region11: #{tpu_custom_call.1} parent=5 // pred_region
        %s245 = ssub.s32 %s20, 1
        // Predicated region
        $region13: #{tpu_custom_call.1} parent=11 // pred_check
          %p246 = pneg %p109
        $region14: #{tpu_custom_call.1} parent=11 // pred_check_branch
          %248 = sbr.rel (%p246) target = $region16
        $region15: #{tpu_custom_call.1} parent=11 // pred_region
          _
        $region16: #{tpu_custom_call.1} parent=11 // pred_fallthru
          _
        // Predicated region
        $region17: #{tpu_custom_call.1} parent=11 // pred_check
          %p249 = pneg %p130
        $region18: #{tpu_custom_call.1} parent=11 // pred_check_branch
          %251 = sbr.rel (%p249) target = $region20
        $region19: #{tpu_custom_call.1} parent=11 // pred_region
          _
        $region20: #{tpu_custom_call.1} parent=11 // pred_fallthru
          _
        // Predicated region
        $region21: #{tpu_custom_call.1} parent=11 // pred_check
          %p252 = pneg %p203
        $region22: #{tpu_custom_call.1} parent=11 // pred_check_branch
          %254 = sbr.rel (%p252) target = $region24
        $region23: #{tpu_custom_call.1} parent=11 // pred_region
          _
        $region24: #{tpu_custom_call.1} parent=11 // pred_fallthru
          _
      $region12: #{tpu_custom_call.1} parent=5 // pred_fallthru
        _
      %p255 = scmp.lt.s32.totalorder %s20, 4
      // Predicated region
      $region25: #{tpu_custom_call.1} parent=5 // pred_check
        %p256 = pneg %p255
      $region26: #{tpu_custom_call.1} parent=5 // pred_check_branch
        %258 = sbr.rel (%p256) target = $region28
      $region27: #{tpu_custom_call.1} parent=5 // pred_region
        // Predicated region
        $region29: #{tpu_custom_call.1} parent=27 // pred_check
          %p259 = pneg %p54
        $region30: #{tpu_custom_call.1} parent=27 // pred_check_branch
          %261 = sbr.rel (%p259) target = $region32
        $region31: #{tpu_custom_call.1} parent=27 // pred_region
          %p262 = scmp.lt.s32.totalorder %s27, 1
          %s263 = scalar_select %p262, %s27, 1
          %p264 = scmp.lt.s32.totalorder %s28, 1
          %s265 = scalar_select %p264, %s28, 1
          %s266 = smul.addr %s263, 2
          %s267 = sadd.s32 %s265, %s266
          %s268 = smul.addr %s267, 4
          %s269 = scalar_lea.vmem %s0, %s268
        $region32: #{tpu_custom_call.1} parent=27 // pred_fallthru
          _
        // Predicated region
        $region33: #{tpu_custom_call.1} parent=27 // pred_check
          %p270 = pneg %p82
        $region34: #{tpu_custom_call.1} parent=27 // pred_check_branch
          %272 = sbr.rel (%p270) target = $region36
        $region35: #{tpu_custom_call.1} parent=27 // pred_region
          %s273 = sand.u32 %s72, 1
          %s274 = scalar_lea.sflag [#allocation4], %s273
          %s275 = sand.u32 %s72, 1
          %s276 = smul.addr %s275, 4
          %s277 = scalar_lea.vmem [#allocation3], %s276
          %279 = vsyncadd %s274, 0
          %s280 = smul.addr %s27, 2
          %s281 = sadd.s32 %s28, %s280
          %s282 = smul.addr %s281, 4
          %s283 = scalar_lea.hbm %s1, %s282
          %s285 = sshll.u32 %s283, 4
          %s286 = int_to_ptr.hbm [resolvable:$true] %s285
          %s287 = sshll.u32 %s277, 4
          %s288 = int_to_ptr.vmem [resolvable:$true] %s287
          %290 = dma.hbm_to_vmem [thread:$0]  %s286, 64, %s288, %s274
        $region36: #{tpu_custom_call.1} parent=27 // pred_fallthru
          _
        // Predicated region
        $region37: #{tpu_custom_call.1} parent=27 // pred_check
          %p291 = pneg %p150
        $region38: #{tpu_custom_call.1} parent=27 // pred_check_branch
          %293 = sbr.rel (%p291) target = $region40
        $region39: #{tpu_custom_call.1} parent=27 // pred_region
          %p294 = scmp.lt.s32.totalorder %s27, 1
          %s295 = scalar_select %p294, %s27, 1
          %s296 = scalar_lea.vmem %s4, %s295
        $region40: #{tpu_custom_call.1} parent=27 // pred_fallthru
          _
        // Predicated region
        $region41: #{tpu_custom_call.1} parent=27 // pred_check
          %p297 = pneg %p176
        $region42: #{tpu_custom_call.1} parent=27 // pred_check_branch
          %299 = sbr.rel (%p297) target = $region44
        $region43: #{tpu_custom_call.1} parent=27 // pred_region
          %p300 = scmp.lt.s32.totalorder %s27, 1
          %s301 = scalar_select %p300, %s27, 1
          %s302 = scalar_lea.vmem %s5, %s301
        $region44: #{tpu_custom_call.1} parent=27 // pred_fallthru
          _
      $region28: #{tpu_custom_call.1} parent=5 // pred_fallthru
        _
      %p303 = scmp.le.s32.totalorder 1, %s20
      %p304 = scmp.lt.s32.totalorder %s20, 5
      %p305 = pnand %p303, %p304
      %p306 = pneg %p305
      // Predicated region
      $region45: #{tpu_custom_call.1} parent=5 // pred_check
        _
      $region46: #{tpu_custom_call.1} parent=5 // pred_check_branch
        %308 = sbr.rel (%p305) target = $region48
      $region47: #{tpu_custom_call.1} parent=5 // pred_region
        %s309 = ssub.s32 %s20, 1
        %s310 = sand.u32 %s75, 1
        %s311 = scalar_lea.sflag [#allocation4], %s310
        %s312 = sand.u32 %s75, 1
        %s313 = smul.addr %s312, 4
        %s314 = scalar_lea.vmem [#allocation3], %s313
        // Predicated region
        $region49: #{tpu_custom_call.1} parent=47 // pred_check
          %p315 = pneg %p88
        $region50: #{tpu_custom_call.1} parent=47 // pred_check_branch
          %317 = sbr.rel (%p315) target = $region52
        $region51: #{tpu_custom_call.1} parent=47 // pred_region
          %319 = dma.done %s311, 64
        $region52: #{tpu_custom_call.1} parent=47 // pred_fallthru
          _
        %p320 = scmp.lt.s32.totalorder %s29, 1
        %s321 = scalar_select %p320, %s29, 1
        %p322 = scmp.lt.s32.totalorder %s30, 1
        %s323 = scalar_select %p322, %s30, 1
        %s324 = smul.addr %s321, 2
        %s325 = sadd.s32 %s323, %s324
        %s326 = smul.addr %s325, 4
        %s327 = scalar_lea.vmem %s0, %s326
        %p328 = pneg %p60
        %p329 = pneg %p57
        %s330 = sand.u32 %s75, 1
        %s331 = scalar_lea.sflag [#allocation4], %s330
        %s332 = sand.u32 %s75, 1
        %s333 = smul.addr %s332, 4
        %s334 = scalar_lea.vmem [#allocation3], %s333
        %p335 = pneg %p88
        %p336 = pneg %p85
        %p337 = pneg %p109
        %p338 = pneg %p106
        %p339 = pneg %p130
        %p340 = pneg %p127
        %p341 = scmp.lt.s32.totalorder %s29, 1
        %s342 = scalar_select %p341, %s29, 1
        %s343 = scalar_lea.vmem %s4, %s342
        %p344 = pneg %p156
        %p345 = pneg %p153
        %p346 = scmp.lt.s32.totalorder %s29, 1
        %s347 = scalar_select %p346, %s29, 1
        %s348 = scalar_lea.vmem %s5, %s347
        %p349 = pneg %p182
        %p350 = pneg %p179
        %p351 = pneg %p203
        %p352 = pneg %p200
        %p353 = pneg %p231
        %p354 = pneg %p228
        %s355 = sand.u32 %s218, 1
        %s356 = scalar_lea.sflag [#allocation5], %s355
        %s357 = sand.u32 %s218, 1
        %s358 = smul.addr %s357, 4
        %s359 = scalar_lea.vmem [#allocation6], %s358
        %p360 = scmp.lt.s32.totalorder %s29, 1
        %s361 = scalar_select %p360, %s29, 1
        %p362 = scmp.lt.s32.totalorder %s30, 1
        %s363 = scalar_select %p362, %s30, 1
        %s364 = smul.addr %s361, 2
        %s365 = sadd.s32 %s363, %s364
        %s366 = smul.addr %s365, 4
        %s367 = scalar_lea.vmem %s0, %s366
        %p368 = scmp.lt.s32.totalorder %s29, 1
        %s369 = scalar_select %p368, %s29, 1
        %s370 = scalar_lea.vmem %s4, %s369
        %p371 = scmp.lt.s32.totalorder %s29, 1
        %s372 = scalar_select %p371, %s29, 1
        %s373 = scalar_lea.vmem %s5, %s372
        %v374 = vld [vmem:[%s367] sm:$0xf]
        %v375 = vld [vmem:[%s314] sm:$0xf]
        %v376 = vlaneseq
        %v377 = vshrl.u32 %v376, 7
        %vm378 = vcmp.lt.s32.totalorder %v377, 4
        %v379 = vld [vmem:[%s2] sm:$0x1f]
        %v380 = vld [vmem:[%s370] sm:$0x1]
        %v382 = vperm.slane %v380, 0
        %v384 = vsel %vm378, %v382, 1.0
        %v385 = vmul.f32 %v379, %v384
        %v386 = vld [vmem:[%s3] sm:$0x1f]
        %v387 = vld [vmem:[%s373] sm:$0x1]
        %v389 = vperm.slane %v387, 0
        %v391 = vsel %vm378, %v389, 1.0
        %v392 = vmul.f32 %v386, %v391
        %vm393 = vcmask 31744
        %v395 = vsel %vm393, %v392, 0
        %vm397 = vcmask 1043456
        %v399 = vsel %vm397, %v375, 0
        %401 = vmatpush.msra.mxu0 0.0
        %402 = vmatpush.msra.mxu0 0.0
        %403 = vmatpush.msra.mxu0 0.0
        %404 = vmatpush.msra.mxu0 0.0
        %405 = vmatpush.msra.mxu0 0.0
        %406 = vmatpush.msra.mxu0 0.0
        %407 = vmatpush.msra.mxu0 0.0
        %408 = vmatpush.msra.mxu0 0.0
        %409 = vmatpush.msra.mxu0 0.0
        %410 = vmatpush.msra.mxu0 0.0
        %411 = vmatpush.msra.mxu0 0.0
        %412 = vmatpush.msra.mxu0 0.0
        %413 = vmatpush.msra.mxu0 0.0
        %414 = vmatpush.msra.mxu0 0.0
        %415 = vmatpush.msra.mxu0 0.0
        %416 = vmatpush.msra.mxu0 %v399
        %417 = vmatmul.f32.gmra.mxu0 %v395
        %v418 = vpop.f32.mrf.mxu0
        %v419 = vadd.f32 0.0, %v418
        %420 = vdwg.mxu0
        %v422 = vsel %vm393, %v385, 0
        %v425 = vsel %vm397, %v374, 0
        %427 = vmatpush.msra.mxu0 0.0
        %428 = vmatpush.msra.mxu0 0.0
        %429 = vmatpush.msra.mxu0 0.0
        %430 = vmatpush.msra.mxu0 0.0
        %431 = vmatpush.msra.mxu0 0.0
        %432 = vmatpush.msra.mxu0 0.0
        %433 = vmatpush.msra.mxu0 0.0
        %434 = vmatpush.msra.mxu0 0.0
        %435 = vmatpush.msra.mxu0 0.0
        %436 = vmatpush.msra.mxu0 0.0
        %437 = vmatpush.msra.mxu0 0.0
        %438 = vmatpush.msra.mxu0 0.0
        %439 = vmatpush.msra.mxu0 0.0
        %440 = vmatpush.msra.mxu0 0.0
        %441 = vmatpush.msra.mxu0 0.0
        %442 = vmatpush.msra.mxu0 %v425
        %443 = vmatmul.f32.gmra.mxu0 %v422
        %v444 = vpop.f32.mrf.mxu0
        %v445 = vadd.f32 %v419, %v444
        %446 = vdwg.mxu0
        %s447 = sld [smem:[#allocation2]]
        %v448 = vstv %s447
        %v449 = vadd.f32 %v445, %v448
        %v450 = vxor.u32 %v449, 2147483648
        %v451 = vmul.f32 %v450, 1.442695
        %v452 = vpow.pop %v451
        %v453 = vadd.f32 %v452, 1.0
        %v454 = vrcp.pop %v453
        %v455 = vmul.f32 %v453, %v454
        %v456 = vsub.f32 1.0, %v455
        %v457 = vmul.f32 %v454, %v456
        %v458 = vadd.f32 %v454, %v457
        %vm459 = vweird.f32 %v453
        %vm460 = vweird.f32 %v454
        %vm461 = vmor %vm459, %vm460
        %v462 = vsel %vm461, %v454, %v458
        %v463 = vand.u32 2147483647, %v453
        %vm464 = vcmp.eq.f32.partialorder %v463, 8.507059e+37
        %v465 = vand.u32 %v453, 2147483648
        %v466 = vor.u32 1.1754944e-38, %v465
        %v467 = vsel %vm464, %v466, %v462
        %v468 = vmul.f32 1.0, %v467
        %v469 = vperm.slane %v468, 4
        %v470 = vmul.f32 %v445, %v469
        %471 = vst [vmem:[%s359] sm:$0xf] %v470
        %s472 = sand.u32 %s218, 1
        %s473 = scalar_lea.sflag [#allocation5], %s472
        %s474 = sand.u32 %s218, 1
        %s475 = smul.addr %s474, 4
        %s476 = scalar_lea.vmem [#allocation6], %s475
        // Predicated region
        $region53: #{tpu_custom_call.1} parent=47 // pred_check
          %p477 = pneg %p228
        $region54: #{tpu_custom_call.1} parent=47 // pred_check_branch
          %479 = sbr.rel (%p477) target = $region56
        $region55: #{tpu_custom_call.1} parent=47 // pred_region
          %481 = vsyncadd %s473, 0
          %s482 = smul.addr %s29, 2
          %s483 = sadd.s32 %s30, %s482
          %s484 = smul.addr %s483, 4
          %s485 = scalar_lea.hbm %s7, %s484
          %s487 = sshll.u32 %s476, 4
          %s488 = int_to_ptr.vmem [resolvable:$true] %s487
          %s489 = sshll.u32 %s485, 4
          %s490 = int_to_ptr.hbm [resolvable:$true] %s489
          %492 = dma.vmem_to_hbm [thread:$0]  %s488, 64, %s490, %s473
        $region56: #{tpu_custom_call.1} parent=47 // pred_fallthru
          _
      $region48: #{tpu_custom_call.1} parent=5 // pred_fallthru
        _
      %p493 = scmp.le.s32.totalorder 2, %s20
      // Predicated region
      $region57: #{tpu_custom_call.1} parent=5 // pred_check
        %p494 = pneg %p493
      $region58: #{tpu_custom_call.1} parent=5 // pred_check_branch
        %496 = sbr.rel (%p494) target = $region60
      $region59: #{tpu_custom_call.1} parent=5 // pred_region
        %s497 = ssub.s32 %s20, 2
        // Predicated region
        $region61: #{tpu_custom_call.1} parent=59 // pred_check
          %p498 = pneg %p234
        $region62: #{tpu_custom_call.1} parent=59 // pred_check_branch
          %500 = sbr.rel (%p498) target = $region64
        $region63: #{tpu_custom_call.1} parent=59 // pred_region
          %s501 = sand.u32 %s219, 1
          %s502 = scalar_lea.sflag [#allocation5], %s501
          %s503 = sand.u32 %s219, 1
          %s504 = smul.addr %s503, 4
          %s505 = scalar_lea.vmem [#allocation6], %s504
          %507 = dma.done %s502, 64
        $region64: #{tpu_custom_call.1} parent=59 // pred_fallthru
          _
      $region60: #{tpu_custom_call.1} parent=5 // pred_fallthru
        _
    $region6: #{tpu_custom_call.1} parent=1 // loop_footer
      %s24 = sadd.s32 1, %s20
    $region7: #{tpu_custom_call.1} parent=1 // loop_footer_branch
      %19 = sbr.rel target = $region3
    $region8: #{tpu_custom_call.1} parent=1 // loop_exit
      _
    %508 = vsyncpa [#allocation4], 1
    %s509 = scalar_lea.sflag [#allocation4], 1
    %510 = vsyncpa %s509, 1
    %511 = vsyncpa [#allocation5], 1
    %s512 = scalar_lea.sflag [#allocation5], 1
    %513 = vsyncpa %s512, 1

</llo_original>
